<compile_context>
chip_gen: v7x
topology: tpu7x:2x2x1
jax: 0.10.0
libtpu: 0.0.40
codegen_flags: <defaults>
</compile_context>

<pallas_src>
import functools

import jax
import jax.numpy as jnp
from jax.experimental import pallas as pl
from jax.experimental.pallas import tpu as pltpu


def _round_up(x, m):
    return ((x + m - 1) // m) * m


def _mlp_kernel(x_ref, w1_ref, b1_ref, w2_ref, b2_ref, o_ref):
    # fc1: [TB, 512] @ [512, 256] on the MXU (bf16 operands, f32 accumulation).
    h = jnp.dot(x_ref[...], w1_ref[...], preferred_element_type=jnp.float32)
    h = jnp.maximum(h + b1_ref[...], 0.0)                      # bias + ReLU in f32 (VPU)
    # fc2 (out_features == 1): elementwise multiply + lane reduction (VPU/XLU)
    # instead of a wasteful single-column MXU matmul.
    y = jnp.sum(h * w2_ref[...], axis=-1, keepdims=True)       # [TB, 1] f32
    y = jnp.transpose(y)                                       # [1, TB] lane-dense row
    # scalar bias from SMEM + tanh (EUP), stored as a dense [1, TB] row.
    o_ref[...] = jnp.tanh(y + b2_ref[0]).astype(o_ref.dtype)


@functools.partial(jax.jit, static_argnames=("block_b",))
def distance_regressor(x, w1, b1, w2, b2, *, block_b=1024):
    """x: [B, 512]; w1: [512, 256]; b1: [256]; w2: [256, 1]; b2: [1] -> [B, 1]."""
    B, d_in = x.shape
    d_hidden = w1.shape[1]

    # Batch tile: multiple of 128 (lane-dense output row, full MXU sublane tiles),
    # capped at block_b. Pad the batch up to a whole number of tiles.
    TB = min(block_b, _round_up(max(B, 1), 128))
    Bp = _round_up(B, TB)
    num_tiles = Bp // TB

    # bf16 stream for the MXU operands (halves the dominant HBM read of x / w1).
    x_p = x.astype(jnp.bfloat16)
    if Bp != B:
        x_p = jnp.pad(x_p, ((0, Bp - B), (0, 0)))
    w1_bf = w1.astype(jnp.bfloat16)
    b1_row = b1.reshape(1, d_hidden).astype(jnp.float32)
    w2_row = w2.reshape(1, d_hidden).astype(jnp.float32)
    b2_s = b2.reshape(1).astype(jnp.float32)

    out = pl.pallas_call(
        _mlp_kernel,
        out_shape=jax.ShapeDtypeStruct((num_tiles, TB), jnp.float32),
        grid_spec=pltpu.PrefetchScalarGridSpec(
            num_scalar_prefetch=0,
            grid=(num_tiles,),
            in_specs=[
                pl.BlockSpec((TB, d_in), lambda i: (i, 0)),         # x: streamed per tile
                pl.BlockSpec((d_in, d_hidden), lambda i: (0, 0)),   # w1: VMEM-resident
                pl.BlockSpec((1, d_hidden), lambda i: (0, 0)),      # b1: VMEM-resident
                pl.BlockSpec((1, d_hidden), lambda i: (0, 0)),      # w2 row: VMEM-resident
                pl.BlockSpec(memory_space=pltpu.SMEM),              # b2: scalar in SMEM
            ],
            out_specs=pl.BlockSpec((1, TB), lambda i: (i, 0)),      # lane-dense output row
        ),
        compiler_params=pltpu.CompilerParams(
            dimension_semantics=("parallel",),                       # shard batch across TCs
        ),
        cost_estimate=pl.CostEstimate(
            flops=2 * Bp * d_in * d_hidden + 2 * Bp * d_hidden,
            transcendentals=Bp,
            bytes_accessed=(Bp * d_in * 2            # x (bf16)
                            + d_in * d_hidden * 2    # w1 (bf16)
                            + 2 * d_hidden * 4 + 4   # b1, w2 row, b2 (f32)
                            + Bp * 4),               # output (f32)
        ),
    )(x_p, w1_bf, b1_row, w2_row, b2_s)

    return out.reshape(-1)[:B].reshape(B, 1).astype(x.dtype)


def init_params(key):
    """Deterministic init matching nn.Linear shapes (weights stored transposed)."""
    k1, k2, k3, k4 = jax.random.split(key, 4)
    in1, out1 = 512, 256
    in2, out2 = 256, 1
    lim1 = 1.0 / (in1 ** 0.5)
    lim2 = 1.0 / (in2 ** 0.5)
    w1 = jax.random.uniform(k1, (in1, out1), jnp.float32, -lim1, lim1)
    b1 = jax.random.uniform(k2, (out1,), jnp.float32, -lim1, lim1)
    w2 = jax.random.uniform(k3, (in2, out2), jnp.float32, -lim2, lim2)
    b2 = jax.random.uniform(k4, (out2,), jnp.float32, -lim2, lim2)
    return w1, b1, w2, b2


def reference(x, w1, b1, w2, b2, *, bf16_fc1=True):
    """Pure-JAX reference. bf16_fc1=True mirrors the kernel's bf16 MXU operands."""
    if bf16_fc1:
        h = jnp.dot(x.astype(jnp.bfloat16), w1.astype(jnp.bfloat16),
                    preferred_element_type=jnp.float32)
    else:
        h = jnp.dot(x, w1, precision=jax.lax.Precision.HIGHEST)
    h = jnp.maximum(h + b1, 0.0)
    y = jnp.sum(h * w2.reshape(1, -1), axis=-1, keepdims=True) + b2
    return jnp.tanh(y)


if __name__ == "__main__":
    key = jax.random.PRNGKey(0)
    kx, kp, kx2 = jax.random.split(key, 3)

    w1, b1, w2, b2 = init_params(kp)

    # Small single-tile case.
    B = 8
    x = jax.random.normal(kx, (B, 512), jnp.float32)
    y = jax.block_until_ready(distance_regressor(x, w1, b1, w2, b2))
    assert y.shape == (B, 1), y.shape
    y_ref = reference(x, w1, b1, w2, b2, bf16_fc1=True)
    y_f32 = reference(x, w1, b1, w2, b2, bf16_fc1=False)
    assert jnp.allclose(y, y_ref, atol=1e-3, rtol=1e-3), (
        f"max abs err vs bf16-matched ref = {jnp.max(jnp.abs(y - y_ref))}")
    assert jnp.allclose(y, y_f32, atol=2e-2, rtol=2e-2), (
        f"max abs err vs f32 ref = {jnp.max(jnp.abs(y - y_f32))}")

    # Multi-tile case: exercises the batch grid, resident weights and padding.
    B2 = 300
    x2 = jax.random.normal(kx2, (B2, 512), jnp.float32)
    y2 = jax.block_until_ready(distance_regressor(x2, w1, b1, w2, b2, block_b=128))
    assert y2.shape == (B2, 1), y2.shape
    y2_ref = reference(x2, w1, b1, w2, b2, bf16_fc1=True)
    assert jnp.allclose(y2, y2_ref, atol=1e-3, rtol=1e-3), (
        f"max abs err (multi-tile) = {jnp.max(jnp.abs(y2 - y2_ref))}")

    print("KERNEL_OK")
</pallas_src>

<mosaic_0001>
module attributes {stable_mosaic.version = 11 : i64} {
  func.func @_mlp_kernel(%arg0: i32, %arg1: memref<128x512xbf16, #tpu.memory_space<vmem>>, %arg2: memref<512x256xbf16, #tpu.memory_space<vmem>>, %arg3: memref<1x256xf32, #tpu.memory_space<vmem>>, %arg4: memref<1x256xf32, #tpu.memory_space<vmem>>, %arg5: memref<1xf32, #tpu.memory_space<smem>>, %arg6: memref<1x128xf32, #tpu.memory_space<vmem>>) attributes {dimension_semantics = [#tpu.dimension_semantics<parallel>], iteration_bounds = array<i64: 1>, scalar_prefetch = 0 : i64, scratch_operands = 0 : i64, tpu.core_type = #tpu.core_type<tc>, window_params = [{transform_indices = @transform_0, window_bounds = array<i64: 128, 512>}, {pipeline_mode = #tpu.pipeline_mode<synchronous>, transform_indices = @transform_1, window_bounds = array<i64: 512, 256>}, {pipeline_mode = #tpu.pipeline_mode<synchronous>, transform_indices = @transform_2, window_bounds = array<i64: 1, 256>}, {pipeline_mode = #tpu.pipeline_mode<synchronous>, transform_indices = @transform_3, window_bounds = array<i64: 1, 256>}, {transform_indices = @transform_4, window_bounds = array<i64: 1>}, {transform_indices = @transform_5, window_bounds = array<i64: 1, 128>}]} {
    %c0 = arith.constant 0 : index
    %c0_0 = arith.constant 0 : index
    %0 = vector.load %arg1[%c0, %c0_0] : memref<128x512xbf16, #tpu.memory_space<vmem>>, vector<128x512xbf16>
    %c0_1 = arith.constant 0 : index
    %c0_2 = arith.constant 0 : index
    %1 = vector.load %arg2[%c0_1, %c0_2] : memref<512x256xbf16, #tpu.memory_space<vmem>>, vector<512x256xbf16>
    %cst = arith.constant dense<0.000000e+00> : vector<128x256xf32>
    %2 = tpu.matmul %0, %1, %cst {dimension_numbers = #tpu.dot_dimension_numbers<[1], [0], [0], [1], [0, 0, 1, 1], [], []>} : vector<128x512xbf16>, vector<512x256xbf16>, vector<128x256xf32> -> vector<128x256xf32>
    %c0_3 = arith.constant 0 : index
    %c0_4 = arith.constant 0 : index
    %3 = vector.load %arg3[%c0_3, %c0_4] : memref<1x256xf32, #tpu.memory_space<vmem>>, vector<1x256xf32>
    %4 = vector.broadcast %3 : vector<1x256xf32> to vector<128x256xf32>
    %5 = arith.addf %2, %4 : vector<128x256xf32>
    %cst_5 = arith.constant 0.000000e+00 : f32
    %6 = vector.broadcast %cst_5 : f32 to vector<128x256xf32>
    %7 = arith.maximumf %5, %6 : vector<128x256xf32>
    %c0_6 = arith.constant 0 : index
    %c0_7 = arith.constant 0 : index
    %8 = vector.load %arg4[%c0_6, %c0_7] : memref<1x256xf32, #tpu.memory_space<vmem>>, vector<1x256xf32>
    %9 = vector.broadcast %8 : vector<1x256xf32> to vector<128x256xf32>
    %10 = arith.mulf %7, %9 : vector<128x256xf32>
    %cst_8 = arith.constant dense<0.000000e+00> : vector<128xf32>
    %11 = vector.multi_reduction <add>, %10, %cst_8 [1] : vector<128x256xf32> to vector<128xf32>
    %12 = vector.shape_cast %11 : vector<128xf32> to vector<128x1xf32>
    %13 = tpu.transpose %12, [1, 0] : vector<128x1xf32> -> vector<1x128xf32>
    %c0_9 = arith.constant 0 : index
    %14 = memref.load %arg5[%c0_9] : memref<1xf32, #tpu.memory_space<smem>>
    %15 = vector.broadcast %14 : f32 to vector<1x128xf32>
    %16 = arith.addf %13, %15 : vector<1x128xf32>
    %17 = math.tanh %16 : vector<1x128xf32>
    %c0_10 = arith.constant 0 : index
    %c0_11 = arith.constant 0 : index
    %18 = vector.load %arg6[%c0_10, %c0_11] : memref<1x128xf32, #tpu.memory_space<vmem>>, vector<1x128xf32>
    tpu.vector_store %arg6[%c0_10, %c0_11], %17 {strides = array<i32>} : memref<1x128xf32, #tpu.memory_space<vmem>>, vector<1x128xf32>,
    return
  }
  func.func @transform_0(%arg0: i32) -> (i32, i32) {
    %c0_i32 = arith.constant 0 : i32
    %c0_i32_0 = arith.constant 0 : i32
    return %arg0, %c0_i32 : i32, i32
  }
  func.func @transform_1(%arg0: i32) -> (i32, i32) {
    %c0_i32 = arith.constant 0 : i32
    %c0_i32_0 = arith.constant 0 : i32
    %c0_i32_1 = arith.constant 0 : i32
    return %c0_i32, %c0_i32_0 : i32, i32
  }
  func.func @transform_2(%arg0: i32) -> (i32, i32) {
    %c0_i32 = arith.constant 0 : i32
    %c0_i32_0 = arith.constant 0 : i32
    %c0_i32_1 = arith.constant 0 : i32
    return %c0_i32, %c0_i32_0 : i32, i32
  }
  func.func @transform_3(%arg0: i32) -> (i32, i32) {
    %c0_i32 = arith.constant 0 : i32
    %c0_i32_0 = arith.constant 0 : i32
    %c0_i32_1 = arith.constant 0 : i32
    return %c0_i32, %c0_i32_0 : i32, i32
  }
  func.func @transform_4(%arg0: i32) -> i32 {
    %c0_i32 = arith.constant 0 : i32
    %c0_i32_0 = arith.constant 0 : i32
    return %c0_i32 : i32
  }
  func.func @transform_5(%arg0: i32) -> (i32, i32) {
    %c0_i32 = arith.constant 0 : i32
    %c0_i32_0 = arith.constant 0 : i32
    return %arg0, %c0_i32 : i32, i32
  }
}

</mosaic_0001>

<llo_original>
// kernel: distance_regressor.1
$region0: #{distance_regressor.1}
  #allocation0 [shape = 'u32[]', space=smem, size = 0x4, offset = 0x4, fixed_abs, tag = 'smem constant byte address 0x4 - core index']
  #allocation1 [shape = 'u32[144,128]{1,0:T(1,128)}', space=vmem, size = 0x12000, scoped, tag = 'internal scratch']
  #allocation2 [shape = 'f32[1]{0:T(128)S(6)}', space=smem, size = 0x200, scoped, tag = 'scoped memory for distance_regressor.1']
  %s0 = inlined_call_operand.vmem [shape: bf16[128,512], index: 0, kind: input, shape index: {}]
  %s1 = inlined_call_operand.vmem [shape: bf16[512,256], index: 1, kind: input, shape index: {}]
  %s2 = inlined_call_operand.vmem [shape: f32[1,256], index: 2, kind: input, shape index: {}]
  %s3 = inlined_call_operand.vmem [shape: f32[1,256], index: 3, kind: input, shape index: {}]
  %s4 = inlined_call_operand.<no memory space> [shape: f32[1], index: 4, kind: input, shape index: {}]
  %s5 = inlined_call_operand.vmem [shape: f32[1,128], index: 5, kind: output, shape index: {}]
  %s6 = sld [smem:[#allocation0]]
  $region30: #{distance_regressor.1} parent=0
    _
  %s8 = ssub.s32 1, %s6
  %s9 = scalar_select 0, %s8, %s6
  %10 = sst [smem:[#allocation2]] %s4
  // Predicated region
  $region2: #{distance_regressor.1} parent=0 // pred_check
    _
  $region3: #{distance_regressor.1} parent=0 // pred_check_branch
    %12 = sbr.rel (0) target = $region5
  $region4: #{distance_regressor.1} parent=0 // pred_region
    _
  $region5: #{distance_regressor.1} parent=0 // pred_fallthru
    _
  // Predicated region
  $region6: #{distance_regressor.1} parent=0 // pred_check
    _
  $region7: #{distance_regressor.1} parent=0 // pred_check_branch
    %14 = sbr.rel (0) target = $region9
  $region8: #{distance_regressor.1} parent=0 // pred_region
    _
  $region9: #{distance_regressor.1} parent=0 // pred_fallthru
    _
  // Predicated region
  $region10: #{distance_regressor.1} parent=0 // pred_check
    _
  $region11: #{distance_regressor.1} parent=0 // pred_check_branch
    %16 = sbr.rel (0) target = $region13
  $region12: #{distance_regressor.1} parent=0 // pred_region
    _
  $region13: #{distance_regressor.1} parent=0 // pred_fallthru
    _
  // Predicated region
  $region14: #{distance_regressor.1} parent=0 // pred_check
    _
  $region15: #{distance_regressor.1} parent=0 // pred_check_branch
    %18 = sbr.rel (0) target = $region17
  $region16: #{distance_regressor.1} parent=0 // pred_region
    _
  $region17: #{distance_regressor.1} parent=0 // pred_fallthru
    _
  // Predicated region
  $region18: #{distance_regressor.1} parent=0 // pred_check
    _
  $region19: #{distance_regressor.1} parent=0 // pred_check_branch
    %20 = sbr.rel (0) target = $region21
  $region20: #{distance_regressor.1} parent=0 // pred_region
    _
  $region21: #{distance_regressor.1} parent=0 // pred_fallthru
    _
  %v21 = vld [vmem:[%s0] sm:$0xff]
  %v22 = vld [vmem:[%s0 + $0x8] sm:$0xff]
  %v23 = vld [vmem:[%s0 + $0x10] sm:$0xff]
  %v24 = vld [vmem:[%s0 + $0x18] sm:$0xff]
  %v25 = vld [vmem:[%s0 + $0x20] sm:$0xff]
  %v26 = vld [vmem:[%s0 + $0x28] sm:$0xff]
  %v27 = vld [vmem:[%s0 + $0x30] sm:$0xff]
  %v28 = vld [vmem:[%s0 + $0x38] sm:$0xff]
  %v29 = vld [vmem:[%s0 + $0x40] sm:$0xff]
  %v30 = vld [vmem:[%s0 + $0x48] sm:$0xff]
  %v31 = vld [vmem:[%s0 + $0x50] sm:$0xff]
  %v32 = vld [vmem:[%s0 + $0x58] sm:$0xff]
  %v33 = vld [vmem:[%s0 + $0x60] sm:$0xff]
  %v34 = vld [vmem:[%s0 + $0x68] sm:$0xff]
  %v35 = vld [vmem:[%s0 + $0x70] sm:$0xff]
  %v36 = vld [vmem:[%s0 + $0x78] sm:$0xff]
  %v37 = vld [vmem:[%s0 + $0x80] sm:$0xff]
  %v38 = vld [vmem:[%s0 + $0x88] sm:$0xff]
  %v39 = vld [vmem:[%s0 + $0x90] sm:$0xff]
  %v40 = vld [vmem:[%s0 + $0x98] sm:$0xff]
  %v41 = vld [vmem:[%s0 + $0xa0] sm:$0xff]
  %v42 = vld [vmem:[%s0 + $0xa8] sm:$0xff]
  %v43 = vld [vmem:[%s0 + $0xb0] sm:$0xff]
  %v44 = vld [vmem:[%s0 + $0xb8] sm:$0xff]
  %v45 = vld [vmem:[%s0 + $0xc0] sm:$0xff]
  %v46 = vld [vmem:[%s0 + $0xc8] sm:$0xff]
  %v47 = vld [vmem:[%s0 + $0xd0] sm:$0xff]
  %v48 = vld [vmem:[%s0 + $0xd8] sm:$0xff]
  %v49 = vld [vmem:[%s0 + $0xe0] sm:$0xff]
  %v50 = vld [vmem:[%s0 + $0xe8] sm:$0xff]
  %v51 = vld [vmem:[%s0 + $0xf0] sm:$0xff]
  %v52 = vld [vmem:[%s0 + $0xf8] sm:$0xff]
  %v53 = vld [vmem:[%s1] sm:$0xff]
  %v54 = vld [vmem:[%s1 + $0x8] sm:$0xff]
  %v55 = vld [vmem:[%s1 + $0x10] sm:$0xff]
  %v56 = vld [vmem:[%s1 + $0x18] sm:$0xff]
  %v57 = vld [vmem:[%s1 + $0x20] sm:$0xff]
  %v58 = vld [vmem:[%s1 + $0x28] sm:$0xff]
  %v59 = vld [vmem:[%s1 + $0x30] sm:$0xff]
  %v60 = vld [vmem:[%s1 + $0x38] sm:$0xff]
  %v61 = vld [vmem:[%s1 + $0x40] sm:$0xff]
  %v62 = vld [vmem:[%s1 + $0x48] sm:$0xff]
  %v63 = vld [vmem:[%s1 + $0x50] sm:$0xff]
  %v64 = vld [vmem:[%s1 + $0x58] sm:$0xff]
  %v65 = vld [vmem:[%s1 + $0x60] sm:$0xff]
  %v66 = vld [vmem:[%s1 + $0x68] sm:$0xff]
  %v67 = vld [vmem:[%s1 + $0x70] sm:$0xff]
  %v68 = vld [vmem:[%s1 + $0x78] sm:$0xff]
  %v69 = vld [vmem:[%s1 + $0x80] sm:$0xff]
  %v70 = vld [vmem:[%s1 + $0x88] sm:$0xff]
  %v71 = vld [vmem:[%s1 + $0x90] sm:$0xff]
  %v72 = vld [vmem:[%s1 + $0x98] sm:$0xff]
  %v73 = vld [vmem:[%s1 + $0xa0] sm:$0xff]
  %v74 = vld [vmem:[%s1 + $0xa8] sm:$0xff]
  %v75 = vld [vmem:[%s1 + $0xb0] sm:$0xff]
  %v76 = vld [vmem:[%s1 + $0xb8] sm:$0xff]
  %v77 = vld [vmem:[%s1 + $0xc0] sm:$0xff]
  %v78 = vld [vmem:[%s1 + $0xc8] sm:$0xff]
  %v79 = vld [vmem:[%s1 + $0xd0] sm:$0xff]
  %v80 = vld [vmem:[%s1 + $0xd8] sm:$0xff]
  %v81 = vld [vmem:[%s1 + $0xe0] sm:$0xff]
  %v82 = vld [vmem:[%s1 + $0xe8] sm:$0xff]
  %v83 = vld [vmem:[%s1 + $0xf0] sm:$0xff]
  %v84 = vld [vmem:[%s1 + $0xf8] sm:$0xff]
  %v85 = vld [vmem:[%s1 + $0x100] sm:$0xff]
  %v86 = vld [vmem:[%s1 + $0x108] sm:$0xff]
  %v87 = vld [vmem:[%s1 + $0x110] sm:$0xff]
  %v88 = vld [vmem:[%s1 + $0x118] sm:$0xff]
  %v89 = vld [vmem:[%s1 + $0x120] sm:$0xff]
  %v90 = vld [vmem:[%s1 + $0x128] sm:$0xff]
  %v91 = vld [vmem:[%s1 + $0x130] sm:$0xff]
  %v92 = vld [vmem:[%s1 + $0x138] sm:$0xff]
  %v93 = vld [vmem:[%s1 + $0x140] sm:$0xff]
  %v94 = vld [vmem:[%s1 + $0x148] sm:$0xff]
  %v95 = vld [vmem:[%s1 + $0x150] sm:$0xff]
  %v96 = vld [vmem:[%s1 + $0x158] sm:$0xff]
  %v97 = vld [vmem:[%s1 + $0x160] sm:$0xff]
  %v98 = vld [vmem:[%s1 + $0x168] sm:$0xff]
  %v99 = vld [vmem:[%s1 + $0x170] sm:$0xff]
  %v100 = vld [vmem:[%s1 + $0x178] sm:$0xff]
  %v101 = vld [vmem:[%s1 + $0x180] sm:$0xff]
  %v102 = vld [vmem:[%s1 + $0x188] sm:$0xff]
  %v103 = vld [vmem:[%s1 + $0x190] sm:$0xff]
  %v104 = vld [vmem:[%s1 + $0x198] sm:$0xff]
  %v105 = vld [vmem:[%s1 + $0x1a0] sm:$0xff]
  %v106 = vld [vmem:[%s1 + $0x1a8] sm:$0xff]
  %v107 = vld [vmem:[%s1 + $0x1b0] sm:$0xff]
  %v108 = vld [vmem:[%s1 + $0x1b8] sm:$0xff]
  %v109 = vld [vmem:[%s1 + $0x1c0] sm:$0xff]
  %v110 = vld [vmem:[%s1 + $0x1c8] sm:$0xff]
  %v111 = vld [vmem:[%s1 + $0x1d0] sm:$0xff]
  %v112 = vld [vmem:[%s1 + $0x1d8] sm:$0xff]
  %v113 = vld [vmem:[%s1 + $0x1e0] sm:$0xff]
  %v114 = vld [vmem:[%s1 + $0x1e8] sm:$0xff]
  %v115 = vld [vmem:[%s1 + $0x1f0] sm:$0xff]
  %v116 = vld [vmem:[%s1 + $0x1f8] sm:$0xff]
  %v117 = vld [vmem:[%s2] sm:$0x3]
  %v119 = vlaneseq
  %v120 = vshrl.u32 %v119, 7
  %v121 = vsub.s32 0, %v120
  %v122 = vrot.slane %v117, %v121
  %v123 = vlaneseq
  %v124 = vshrl.u32 %v123, 7
  %v125 = vsub.s32 1, %v124
  %v126 = vrot.slane %v117, %v125
  %v161 = vunpack.c.l.b16 %v21
  %v162 = vunpack.c.h.b16 %v21
  %v163 = vunpack.c.l.b16 %v22
  %v164 = vunpack.c.h.b16 %v22
  %v165 = vunpack.c.l.b16 %v23
  %v166 = vunpack.c.h.b16 %v23
  %v167 = vunpack.c.l.b16 %v24
  %v168 = vunpack.c.h.b16 %v24
  %v169 = vunpack.c.l.b16 %v25
  %v170 = vunpack.c.h.b16 %v25
  %v171 = vunpack.c.l.b16 %v26
  %v172 = vunpack.c.h.b16 %v26
  %v173 = vunpack.c.l.b16 %v27
  %v174 = vunpack.c.h.b16 %v27
  %v175 = vunpack.c.l.b16 %v28
  %v176 = vunpack.c.h.b16 %v28
  %v177 = vunpack.c.l.b16 %v29
  %v178 = vunpack.c.h.b16 %v29
  %v179 = vunpack.c.l.b16 %v30
  %v180 = vunpack.c.h.b16 %v30
  %v181 = vunpack.c.l.b16 %v31
  %v182 = vunpack.c.h.b16 %v31
  %v183 = vunpack.c.l.b16 %v32
  %v184 = vunpack.c.h.b16 %v32
  %v185 = vunpack.c.l.b16 %v33
  %v186 = vunpack.c.h.b16 %v33
  %v187 = vunpack.c.l.b16 %v34
  %v188 = vunpack.c.h.b16 %v34
  %v189 = vunpack.c.l.b16 %v35
  %v190 = vunpack.c.h.b16 %v35
  %v191 = vunpack.c.l.b16 %v36
  %v192 = vunpack.c.h.b16 %v36
  %v193 = vunpack.c.l.b16 %v37
  %v194 = vunpack.c.h.b16 %v37
  %v195 = vunpack.c.l.b16 %v38
  %v196 = vunpack.c.h.b16 %v38
  %v197 = vunpack.c.l.b16 %v39
  %v198 = vunpack.c.h.b16 %v39
  %v199 = vunpack.c.l.b16 %v40
  %v200 = vunpack.c.h.b16 %v40
  %v201 = vunpack.c.l.b16 %v41
  %v202 = vunpack.c.h.b16 %v41
  %v203 = vunpack.c.l.b16 %v42
  %v204 = vunpack.c.h.b16 %v42
  %v205 = vunpack.c.l.b16 %v43
  %v206 = vunpack.c.h.b16 %v43
  %v207 = vunpack.c.l.b16 %v44
  %v208 = vunpack.c.h.b16 %v44
  %v209 = vunpack.c.l.b16 %v45
  %v210 = vunpack.c.h.b16 %v45
  %v211 = vunpack.c.l.b16 %v46
  %v212 = vunpack.c.h.b16 %v46
  %v213 = vunpack.c.l.b16 %v47
  %v214 = vunpack.c.h.b16 %v47
  %v215 = vunpack.c.l.b16 %v48
  %v216 = vunpack.c.h.b16 %v48
  %v217 = vunpack.c.l.b16 %v49
  %v218 = vunpack.c.h.b16 %v49
  %v219 = vunpack.c.l.b16 %v50
  %v220 = vunpack.c.h.b16 %v50
  %v221 = vunpack.c.l.b16 %v51
  %v222 = vunpack.c.h.b16 %v51
  %v223 = vunpack.c.l.b16 %v52
  %v224 = vunpack.c.h.b16 %v52
  %v225 = vpack.c.b16 %v165, %v161
  %v226 = vpack.c.b16 %v166, %v162
  %v227 = vpack.c.b16 %v167, %v163
  %v228 = vpack.c.b16 %v168, %v164
  %v229 = vpack.c.b16 %v173, %v169
  %v230 = vpack.c.b16 %v174, %v170
  %v231 = vpack.c.b16 %v175, %v171
  %v232 = vpack.c.b16 %v176, %v172
  %v233 = vpack.c.b16 %v181, %v177
  %v234 = vpack.c.b16 %v182, %v178
  %v235 = vpack.c.b16 %v183, %v179
  %v236 = vpack.c.b16 %v184, %v180
  %v237 = vpack.c.b16 %v189, %v185
  %v238 = vpack.c.b16 %v190, %v186
  %v239 = vpack.c.b16 %v191, %v187
  %v240 = vpack.c.b16 %v192, %v188
  %v241 = vpack.c.b16 %v197, %v193
  %v242 = vpack.c.b16 %v198, %v194
  %v243 = vpack.c.b16 %v199, %v195
  %v244 = vpack.c.b16 %v200, %v196
  %v245 = vpack.c.b16 %v205, %v201
  %v246 = vpack.c.b16 %v206, %v202
  %v247 = vpack.c.b16 %v207, %v203
  %v248 = vpack.c.b16 %v208, %v204
  %v249 = vpack.c.b16 %v213, %v209
  %v250 = vpack.c.b16 %v214, %v210
  %v251 = vpack.c.b16 %v215, %v211
  %v252 = vpack.c.b16 %v216, %v212
  %v253 = vpack.c.b16 %v221, %v217
  %v254 = vpack.c.b16 %v222, %v218
  %v255 = vpack.c.b16 %v223, %v219
  %v256 = vpack.c.b16 %v224, %v220
  %v353 = vunpack.c.l.b16 %v53
  %v354 = vunpack.c.h.b16 %v53
  %v355 = vunpack.c.l.b16 %v54
  %v356 = vunpack.c.h.b16 %v54
  %v357 = vunpack.c.l.b16 %v55
  %v358 = vunpack.c.h.b16 %v55
  %v359 = vunpack.c.l.b16 %v56
  %v360 = vunpack.c.h.b16 %v56
  %v361 = vunpack.c.l.b16 %v57
  %v362 = vunpack.c.h.b16 %v57
  %v363 = vunpack.c.l.b16 %v58
  %v364 = vunpack.c.h.b16 %v58
  %v365 = vunpack.c.l.b16 %v59
  %v366 = vunpack.c.h.b16 %v59
  %v367 = vunpack.c.l.b16 %v60
  %v368 = vunpack.c.h.b16 %v60
  %v369 = vunpack.c.l.b16 %v61
  %v370 = vunpack.c.h.b16 %v61
  %v371 = vunpack.c.l.b16 %v62
  %v372 = vunpack.c.h.b16 %v62
  %v373 = vunpack.c.l.b16 %v63
  %v374 = vunpack.c.h.b16 %v63
  %v375 = vunpack.c.l.b16 %v64
  %v376 = vunpack.c.h.b16 %v64
  %v377 = vunpack.c.l.b16 %v65
  %v378 = vunpack.c.h.b16 %v65
  %v379 = vunpack.c.l.b16 %v66
  %v380 = vunpack.c.h.b16 %v66
  %v381 = vunpack.c.l.b16 %v67
  %v382 = vunpack.c.h.b16 %v67
  %v383 = vunpack.c.l.b16 %v68
  %v384 = vunpack.c.h.b16 %v68
  %v385 = vunpack.c.l.b16 %v69
  %v386 = vunpack.c.h.b16 %v69
  %v387 = vunpack.c.l.b16 %v70
  %v388 = vunpack.c.h.b16 %v70
  %v389 = vunpack.c.l.b16 %v71
  %v390 = vunpack.c.h.b16 %v71
  %v391 = vunpack.c.l.b16 %v72
  %v392 = vunpack.c.h.b16 %v72
  %v393 = vunpack.c.l.b16 %v73
  %v394 = vunpack.c.h.b16 %v73
  %v395 = vunpack.c.l.b16 %v74
  %v396 = vunpack.c.h.b16 %v74
  %v397 = vunpack.c.l.b16 %v75
  %v398 = vunpack.c.h.b16 %v75
  %v399 = vunpack.c.l.b16 %v76
  %v400 = vunpack.c.h.b16 %v76
  %v401 = vunpack.c.l.b16 %v77
  %v402 = vunpack.c.h.b16 %v77
  %v403 = vunpack.c.l.b16 %v78
  %v404 = vunpack.c.h.b16 %v78
  %v405 = vunpack.c.l.b16 %v79
  %v406 = vunpack.c.h.b16 %v79
  %v407 = vunpack.c.l.b16 %v80
  %v408 = vunpack.c.h.b16 %v80
  %v409 = vunpack.c.l.b16 %v81
  %v410 = vunpack.c.h.b16 %v81
  %v411 = vunpack.c.l.b16 %v82
  %v412 = vunpack.c.h.b16 %v82
  %v413 = vunpack.c.l.b16 %v83
  %v414 = vunpack.c.h.b16 %v83
  %v415 = vunpack.c.l.b16 %v84
  %v416 = vunpack.c.h.b16 %v84
  %v417 = vunpack.c.l.b16 %v85
  %v418 = vunpack.c.h.b16 %v85
  %v419 = vunpack.c.l.b16 %v86
  %v420 = vunpack.c.h.b16 %v86
  %v421 = vunpack.c.l.b16 %v87
  %v422 = vunpack.c.h.b16 %v87
  %v423 = vunpack.c.l.b16 %v88
  %v424 = vunpack.c.h.b16 %v88
  %v425 = vunpack.c.l.b16 %v89
  %v426 = vunpack.c.h.b16 %v89
  %v427 = vunpack.c.l.b16 %v90
  %v428 = vunpack.c.h.b16 %v90
  %v429 = vunpack.c.l.b16 %v91
  %v430 = vunpack.c.h.b16 %v91
  %v431 = vunpack.c.l.b16 %v92
  %v432 = vunpack.c.h.b16 %v92
  %v433 = vunpack.c.l.b16 %v93
  %v434 = vunpack.c.h.b16 %v93
  %v435 = vunpack.c.l.b16 %v94
  %v436 = vunpack.c.h.b16 %v94
  %v437 = vunpack.c.l.b16 %v95
  %v438 = vunpack.c.h.b16 %v95
  %v439 = vunpack.c.l.b16 %v96
  %v440 = vunpack.c.h.b16 %v96
  %v441 = vunpack.c.l.b16 %v97
  %v442 = vunpack.c.h.b16 %v97
  %v443 = vunpack.c.l.b16 %v98
  %v444 = vunpack.c.h.b16 %v98
  %v445 = vunpack.c.l.b16 %v99
  %v446 = vunpack.c.h.b16 %v99
  %v447 = vunpack.c.l.b16 %v100
  %v448 = vunpack.c.h.b16 %v100
  %v449 = vunpack.c.l.b16 %v101
  %v450 = vunpack.c.h.b16 %v101
  %v451 = vunpack.c.l.b16 %v102
  %v452 = vunpack.c.h.b16 %v102
  %v453 = vunpack.c.l.b16 %v103
  %v454 = vunpack.c.h.b16 %v103
  %v455 = vunpack.c.l.b16 %v104
  %v456 = vunpack.c.h.b16 %v104
  %v457 = vunpack.c.l.b16 %v105
  %v458 = vunpack.c.h.b16 %v105
  %v459 = vunpack.c.l.b16 %v106
  %v460 = vunpack.c.h.b16 %v106
  %v461 = vunpack.c.l.b16 %v107
  %v462 = vunpack.c.h.b16 %v107
  %v463 = vunpack.c.l.b16 %v108
  %v464 = vunpack.c.h.b16 %v108
  %v465 = vunpack.c.l.b16 %v109
  %v466 = vunpack.c.h.b16 %v109
  %v467 = vunpack.c.l.b16 %v110
  %v468 = vunpack.c.h.b16 %v110
  %v469 = vunpack.c.l.b16 %v111
  %v470 = vunpack.c.h.b16 %v111
  %v471 = vunpack.c.l.b16 %v112
  %v472 = vunpack.c.h.b16 %v112
  %v473 = vunpack.c.l.b16 %v113
  %v474 = vunpack.c.h.b16 %v113
  %v475 = vunpack.c.l.b16 %v114
  %v476 = vunpack.c.h.b16 %v114
  %v477 = vunpack.c.l.b16 %v115
  %v478 = vunpack.c.h.b16 %v115
  %v479 = vunpack.c.l.b16 %v116
  %v480 = vunpack.c.h.b16 %v116
  %v481 = vpack.c.b16 %v355, %v353
  %v482 = vpack.c.b16 %v356, %v354
  %v483 = vpack.c.b16 %v359, %v357
  %v484 = vpack.c.b16 %v360, %v358
  %v485 = vpack.c.b16 %v363, %v361
  %v486 = vpack.c.b16 %v364, %v362
  %v487 = vpack.c.b16 %v367, %v365
  %v488 = vpack.c.b16 %v368, %v366
  %v489 = vpack.c.b16 %v371, %v369
  %v490 = vpack.c.b16 %v372, %v370
  %v491 = vpack.c.b16 %v375, %v373
  %v492 = vpack.c.b16 %v376, %v374
  %v493 = vpack.c.b16 %v379, %v377
  %v494 = vpack.c.b16 %v380, %v378
  %v495 = vpack.c.b16 %v383, %v381
  %v496 = vpack.c.b16 %v384, %v382
  %v497 = vpack.c.b16 %v387, %v385
  %v498 = vpack.c.b16 %v388, %v386
  %v499 = vpack.c.b16 %v391, %v389
  %v500 = vpack.c.b16 %v392, %v390
  %v501 = vpack.c.b16 %v395, %v393
  %v502 = vpack.c.b16 %v396, %v394
  %v503 = vpack.c.b16 %v399, %v397
  %v504 = vpack.c.b16 %v400, %v398
  %v505 = vpack.c.b16 %v403, %v401
  %v506 = vpack.c.b16 %v404, %v402
  %v507 = vpack.c.b16 %v407, %v405
  %v508 = vpack.c.b16 %v408, %v406
  %v509 = vpack.c.b16 %v411, %v409
  %v510 = vpack.c.b16 %v412, %v410
  %v511 = vpack.c.b16 %v415, %v413
  %v512 = vpack.c.b16 %v416, %v414
  %v513 = vpack.c.b16 %v419, %v417
  %v514 = vpack.c.b16 %v420, %v418
  %v515 = vpack.c.b16 %v423, %v421
  %v516 = vpack.c.b16 %v424, %v422
  %v517 = vpack.c.b16 %v427, %v425
  %v518 = vpack.c.b16 %v428, %v426
  %v519 = vpack.c.b16 %v431, %v429
  %v520 = vpack.c.b16 %v432, %v430
  %v521 = vpack.c.b16 %v435, %v433
  %v522 = vpack.c.b16 %v436, %v434
  %v523 = vpack.c.b16 %v439, %v437
  %v524 = vpack.c.b16 %v440, %v438
  %v525 = vpack.c.b16 %v443, %v441
  %v526 = vpack.c.b16 %v444, %v442
  %v527 = vpack.c.b16 %v447, %v445
  %v528 = vpack.c.b16 %v448, %v446
  %v529 = vpack.c.b16 %v451, %v449
  %v530 = vpack.c.b16 %v452, %v450
  %v531 = vpack.c.b16 %v455, %v453
  %v532 = vpack.c.b16 %v456, %v454
  %v533 = vpack.c.b16 %v459, %v457
  %v534 = vpack.c.b16 %v460, %v458
  %v535 = vpack.c.b16 %v463, %v461
  %v536 = vpack.c.b16 %v464, %v462
  %v537 = vpack.c.b16 %v467, %v465
  %v538 = vpack.c.b16 %v468, %v466
  %v539 = vpack.c.b16 %v471, %v469
  %v540 = vpack.c.b16 %v472, %v470
  %v541 = vpack.c.b16 %v475, %v473
  %v542 = vpack.c.b16 %v476, %v474
  %v543 = vpack.c.b16 %v479, %v477
  %v544 = vpack.c.b16 %v480, %v478
  %609 = vmatprep.subr.bf16.mxu0 %v482
  %610 = vmatpush1.bf16.msra.mxu0 %v481
  %611 = vmatprep.subr.bf16.mxu0 %v484
  %612 = vmatpush1.bf16.msra.mxu0 %v483
  %613 = vmatprep.subr.bf16.mxu0 %v486
  %614 = vmatpush1.bf16.msra.mxu0 %v485
  %615 = vmatprep.subr.bf16.mxu0 %v488
  %616 = vmatpush1.bf16.msra.mxu0 %v487
  %617 = vmatprep.subr.bf16.mxu0 %v490
  %618 = vmatpush1.bf16.msra.mxu0 %v489
  %619 = vmatprep.subr.bf16.mxu0 %v492
  %620 = vmatpush1.bf16.msra.mxu0 %v491
  %621 = vmatprep.subr.bf16.mxu0 %v494
  %622 = vmatpush1.bf16.msra.mxu0 %v493
  %623 = vmatprep.subr.bf16.mxu0 %v496
  %624 = vmatpush1.bf16.msra.mxu0 %v495
  %625 = vmatprep.subr.bf16.mxu0 %v498
  %626 = vmatpush1.bf16.msra.mxu0 %v497
  %627 = vmatprep.subr.bf16.mxu0 %v500
  %628 = vmatpush1.bf16.msra.mxu0 %v499
  %629 = vmatprep.subr.bf16.mxu0 %v502
  %630 = vmatpush1.bf16.msra.mxu0 %v501
  %631 = vmatprep.subr.bf16.mxu0 %v504
  %632 = vmatpush1.bf16.msra.mxu0 %v503
  %633 = vmatprep.subr.bf16.mxu0 %v506
  %634 = vmatpush1.bf16.msra.mxu0 %v505
  %635 = vmatprep.subr.bf16.mxu0 %v508
  %636 = vmatpush1.bf16.msra.mxu0 %v507
  %637 = vmatprep.subr.bf16.mxu0 %v510
  %638 = vmatpush1.bf16.msra.mxu0 %v509
  %639 = vmatprep.subr.bf16.mxu0 %v512
  %640 = vmatpush1.bf16.msra.mxu0 %v511
  %641 = vmatprep.mubr.bf16.mxu0 %v226
  %642 = vmatmul.mubr.bf16.gmra.mrb[0].mxu0 %v225
  %v643 = vpop.f32.mrb[0].mxu0
  %v644 = vadd.f32 %v122, %v643
  %v645 = vpop.f32.mrb[0].mxu0
  %v646 = vadd.f32 %v126, %v645
  %v647 = vpop.f32.mrb[0].mxu0
  %v648 = vadd.f32 %v122, %v647
  %v649 = vpop.f32.mrb[0].mxu0
  %v650 = vadd.f32 %v126, %v649
  %651 = vmatprep.mubr.bf16.mxu0 %v230
  %652 = vmatmul.mubr.bf16.gmra.mrb[0].mxu0 %v229
  %v653 = vpop.f32.mrb[0].mxu0
  %v654 = vadd.f32 %v122, %v653
  %v655 = vpop.f32.mrb[0].mxu0
  %v656 = vadd.f32 %v126, %v655
  %v657 = vpop.f32.mrb[0].mxu0
  %v658 = vadd.f32 %v122, %v657
  %v659 = vpop.f32.mrb[0].mxu0
  %v660 = vadd.f32 %v126, %v659
  %661 = vmatprep.mubr.bf16.mxu0 %v234
  %662 = vmatmul.mubr.bf16.gmra.mrb[0].mxu0 %v233
  %v663 = vpop.f32.mrb[0].mxu0
  %v664 = vadd.f32 %v122, %v663
  %v665 = vpop.f32.mrb[0].mxu0
  %v666 = vadd.f32 %v126, %v665
  %v667 = vpop.f32.mrb[0].mxu0
  %v668 = vadd.f32 %v122, %v667
  %v669 = vpop.f32.mrb[0].mxu0
  %v670 = vadd.f32 %v126, %v669
  %671 = vmatprep.mubr.bf16.mxu0 %v238
  %672 = vmatmul.mubr.bf16.gmra.mrb[0].mxu0 %v237
  %v673 = vpop.f32.mrb[0].mxu0
  %v674 = vadd.f32 %v122, %v673
  %v675 = vpop.f32.mrb[0].mxu0
  %v676 = vadd.f32 %v126, %v675
  %v677 = vpop.f32.mrb[0].mxu0
  %v678 = vadd.f32 %v122, %v677
  %v679 = vpop.f32.mrb[0].mxu0
  %v680 = vadd.f32 %v126, %v679
  %681 = vmatprep.mubr.bf16.mxu0 %v242
  %682 = vmatmul.mubr.bf16.gmra.mrb[0].mxu0 %v241
  %v683 = vpop.f32.mrb[0].mxu0
  %v684 = vadd.f32 %v122, %v683
  %v685 = vpop.f32.mrb[0].mxu0
  %v686 = vadd.f32 %v126, %v685
  %v687 = vpop.f32.mrb[0].mxu0
  %v688 = vadd.f32 %v122, %v687
  %v689 = vpop.f32.mrb[0].mxu0
  %v690 = vadd.f32 %v126, %v689
  %691 = vmatprep.mubr.bf16.mxu0 %v246
  %692 = vmatmul.mubr.bf16.gmra.mrb[0].mxu0 %v245
  %v693 = vpop.f32.mrb[0].mxu0
  %v694 = vadd.f32 %v122, %v693
  %v695 = vpop.f32.mrb[0].mxu0
  %v696 = vadd.f32 %v126, %v695
  %v697 = vpop.f32.mrb[0].mxu0
  %v698 = vadd.f32 %v122, %v697
  %v699 = vpop.f32.mrb[0].mxu0
  %v700 = vadd.f32 %v126, %v699
  %701 = vmatprep.mubr.bf16.mxu0 %v250
  %702 = vmatmul.mubr.bf16.gmra.mrb[0].mxu0 %v249
  %v703 = vpop.f32.mrb[0].mxu0
  %v704 = vadd.f32 %v122, %v703
  %v705 = vpop.f32.mrb[0].mxu0
  %v706 = vadd.f32 %v126, %v705
  %v707 = vpop.f32.mrb[0].mxu0
  %v708 = vadd.f32 %v122, %v707
  %v709 = vpop.f32.mrb[0].mxu0
  %v710 = vadd.f32 %v126, %v709
  %711 = vmatprep.mubr.bf16.mxu0 %v254
  %712 = vmatmul.mubr.bf16.gmra.mrb[0].mxu0 %v253
  %v713 = vpop.f32.mrb[0].mxu0
  %v714 = vadd.f32 %v122, %v713
  %v715 = vpop.f32.mrb[0].mxu0
  %v716 = vadd.f32 %v126, %v715
  %v717 = vpop.f32.mrb[0].mxu0
  %v718 = vadd.f32 %v122, %v717
  %v719 = vpop.f32.mrb[0].mxu0
  %v720 = vadd.f32 %v126, %v719
  %721 = vdwg.mxu0
  %722 = vmatprep.subr.bf16.mxu0 %v514
  %723 = vmatpush1.bf16.msra.mxu0 %v513
  %724 = vmatprep.subr.bf16.mxu0 %v516
  %725 = vmatpush1.bf16.msra.mxu0 %v515
  %726 = vmatprep.subr.bf16.mxu0 %v518
  %727 = vmatpush1.bf16.msra.mxu0 %v517
  %728 = vmatprep.subr.bf16.mxu0 %v520
  %729 = vmatpush1.bf16.msra.mxu0 %v519
  %730 = vmatprep.subr.bf16.mxu0 %v522
  %731 = vmatpush1.bf16.msra.mxu0 %v521
  %732 = vmatprep.subr.bf16.mxu0 %v524
  %733 = vmatpush1.bf16.msra.mxu0 %v523
  %734 = vmatprep.subr.bf16.mxu0 %v526
  %735 = vmatpush1.bf16.msra.mxu0 %v525
  %736 = vmatprep.subr.bf16.mxu0 %v528
  %737 = vmatpush1.bf16.msra.mxu0 %v527
  %738 = vmatprep.subr.bf16.mxu0 %v530
  %739 = vmatpush1.bf16.msra.mxu0 %v529
  %740 = vmatprep.subr.bf16.mxu0 %v532
  %741 = vmatpush1.bf16.msra.mxu0 %v531
  %742 = vmatprep.subr.bf16.mxu0 %v534
  %743 = vmatpush1.bf16.msra.mxu0 %v533
  %744 = vmatprep.subr.bf16.mxu0 %v536
  %745 = vmatpush1.bf16.msra.mxu0 %v535
  %746 = vmatprep.subr.bf16.mxu0 %v538
  %747 = vmatpush1.bf16.msra.mxu0 %v537
  %748 = vmatprep.subr.bf16.mxu0 %v540
  %749 = vmatpush1.bf16.msra.mxu0 %v539
  %750 = vmatprep.subr.bf16.mxu0 %v542
  %751 = vmatpush1.bf16.msra.mxu0 %v541
  %752 = vmatprep.subr.bf16.mxu0 %v544
  %753 = vmatpush1.bf16.msra.mxu0 %v543
  %754 = vmatprep.mubr.bf16.mxu0 %v228
  %755 = vmatmul.mubr.bf16.gmra.mrb[0].mxu0 %v227
  %v756 = vpop.f32.mrb[0].mxu0
  %v757 = vadd.f32 %v644, %v756
  %v758 = vpop.f32.mrb[0].mxu0
  %v759 = vadd.f32 %v646, %v758
  %v760 = vpop.f32.mrb[0].mxu0
  %v761 = vadd.f32 %v648, %v760
  %v762 = vpop.f32.mrb[0].mxu0
  %v763 = vadd.f32 %v650, %v762
  %764 = vmatprep.mubr.bf16.mxu0 %v232
  %765 = vmatmul.mubr.bf16.gmra.mrb[0].mxu0 %v231
  %v766 = vpop.f32.mrb[0].mxu0
  %v767 = vadd.f32 %v654, %v766
  %v768 = vpop.f32.mrb[0].mxu0
  %v769 = vadd.f32 %v656, %v768
  %v770 = vpop.f32.mrb[0].mxu0
  %v771 = vadd.f32 %v658, %v770
  %v772 = vpop.f32.mrb[0].mxu0
  %v773 = vadd.f32 %v660, %v772
  %774 = vmatprep.mubr.bf16.mxu0 %v236
  %775 = vmatmul.mubr.bf16.gmra.mrb[0].mxu0 %v235
  %v776 = vpop.f32.mrb[0].mxu0
  %v777 = vadd.f32 %v664, %v776
  %v778 = vpop.f32.mrb[0].mxu0
  %v779 = vadd.f32 %v666, %v778
  %v780 = vpop.f32.mrb[0].mxu0
  %v781 = vadd.f32 %v668, %v780
  %v782 = vpop.f32.mrb[0].mxu0
  %v783 = vadd.f32 %v670, %v782
  %784 = vmatprep.mubr.bf16.mxu0 %v240
  %785 = vmatmul.mubr.bf16.gmra.mrb[0].mxu0 %v239
  %v786 = vpop.f32.mrb[0].mxu0
  %v787 = vadd.f32 %v674, %v786
  %v788 = vpop.f32.mrb[0].mxu0
  %v789 = vadd.f32 %v676, %v788
  %v790 = vpop.f32.mrb[0].mxu0
  %v791 = vadd.f32 %v678, %v790
  %v792 = vpop.f32.mrb[0].mxu0
  %v793 = vadd.f32 %v680, %v792
  %794 = vmatprep.mubr.bf16.mxu0 %v244
  %795 = vmatmul.mubr.bf16.gmra.mrb[0].mxu0 %v243
  %v796 = vpop.f32.mrb[0].mxu0
  %v797 = vadd.f32 %v684, %v796
  %v798 = vpop.f32.mrb[0].mxu0
  %v799 = vadd.f32 %v686, %v798
  %v800 = vpop.f32.mrb[0].mxu0
  %v801 = vadd.f32 %v688, %v800
  %v802 = vpop.f32.mrb[0].mxu0
  %v803 = vadd.f32 %v690, %v802
  %804 = vmatprep.mubr.bf16.mxu0 %v248
  %805 = vmatmul.mubr.bf16.gmra.mrb[0].mxu0 %v247
  %v806 = vpop.f32.mrb[0].mxu0
  %v807 = vadd.f32 %v694, %v806
  %v808 = vpop.f32.mrb[0].mxu0
  %v809 = vadd.f32 %v696, %v808
  %v810 = vpop.f32.mrb[0].mxu0
  %v811 = vadd.f32 %v698, %v810
  %v812 = vpop.f32.mrb[0].mxu0
  %v813 = vadd.f32 %v700, %v812
  %814 = vmatprep.mubr.bf16.mxu0 %v252
  %815 = vmatmul.mubr.bf16.gmra.mrb[0].mxu0 %v251
  %v816 = vpop.f32.mrb[0].mxu0
  %v817 = vadd.f32 %v704, %v816
  %v818 = vpop.f32.mrb[0].mxu0
  %v819 = vadd.f32 %v706, %v818
  %v820 = vpop.f32.mrb[0].mxu0
  %v821 = vadd.f32 %v708, %v820
  %v822 = vpop.f32.mrb[0].mxu0
  %v823 = vadd.f32 %v710, %v822
  %824 = vmatprep.mubr.bf16.mxu0 %v256
  %825 = vmatmul.mubr.bf16.gmra.mrb[0].mxu0 %v255
  %v826 = vpop.f32.mrb[0].mxu0
  %v827 = vadd.f32 %v714, %v826
  %v828 = vpop.f32.mrb[0].mxu0
  %v829 = vadd.f32 %v716, %v828
  %v830 = vpop.f32.mrb[0].mxu0
  %v831 = vadd.f32 %v718, %v830
  %v832 = vpop.f32.mrb[0].mxu0
  %v833 = vadd.f32 %v720, %v832
  %834 = vdwg.mxu0
  %v835 = vmax.f32 %v757, 0.0
  %v836 = vmax.f32 %v759, 0.0
  %v837 = vmax.f32 %v761, 0.0
  %v838 = vmax.f32 %v763, 0.0
  %v839 = vmax.f32 %v767, 0.0
  %v840 = vmax.f32 %v769, 0.0
  %v841 = vmax.f32 %v771, 0.0
  %v842 = vmax.f32 %v773, 0.0
  %v843 = vmax.f32 %v777, 0.0
  %v844 = vmax.f32 %v779, 0.0
  %v845 = vmax.f32 %v781, 0.0
  %v846 = vmax.f32 %v783, 0.0
  %v847 = vmax.f32 %v787, 0.0
  %v848 = vmax.f32 %v789, 0.0
  %v849 = vmax.f32 %v791, 0.0
  %v850 = vmax.f32 %v793, 0.0
  %v851 = vmax.f32 %v797, 0.0
  %v852 = vmax.f32 %v799, 0.0
  %v853 = vmax.f32 %v801, 0.0
  %v854 = vmax.f32 %v803, 0.0
  %v855 = vmax.f32 %v807, 0.0
  %v856 = vmax.f32 %v809, 0.0
  %v857 = vmax.f32 %v811, 0.0
  %v858 = vmax.f32 %v813, 0.0
  %v859 = vmax.f32 %v817, 0.0
  %v860 = vmax.f32 %v819, 0.0
  %v861 = vmax.f32 %v821, 0.0
  %v862 = vmax.f32 %v823, 0.0
  %v863 = vmax.f32 %v827, 0.0
  %v864 = vmax.f32 %v829, 0.0
  %v865 = vmax.f32 %v831, 0.0
  %v866 = vmax.f32 %v833, 0.0
  %v867 = vld [vmem:[%s3] sm:$0x3]
  %v869 = vlaneseq
  %v870 = vshrl.u32 %v869, 7
  %v871 = vsub.s32 0, %v870
  %v872 = vrot.slane %v867, %v871
  %v873 = vlaneseq
  %v874 = vshrl.u32 %v873, 7
  %v875 = vsub.s32 1, %v874
  %v876 = vrot.slane %v867, %v875
  %v879 = vmul.f32 %v835, %v872
  %v880 = vmul.f32 %v836, %v876
  %v881 = vmul.f32 %v837, %v872
  %v882 = vmul.f32 %v838, %v876
  %v883 = vmul.f32 %v839, %v872
  %v884 = vmul.f32 %v840, %v876
  %v885 = vmul.f32 %v841, %v872
  %v886 = vmul.f32 %v842, %v876
  %v887 = vmul.f32 %v843, %v872
  %v888 = vmul.f32 %v844, %v876
  %v889 = vmul.f32 %v845, %v872
  %v890 = vmul.f32 %v846, %v876
  %v891 = vmul.f32 %v847, %v872
  %v892 = vmul.f32 %v848, %v876
  %v893 = vmul.f32 %v849, %v872
  %v894 = vmul.f32 %v850, %v876
  %v895 = vmul.f32 %v851, %v872
  %v896 = vmul.f32 %v852, %v876
  %v897 = vmul.f32 %v853, %v872
  %v898 = vmul.f32 %v854, %v876
  %v899 = vmul.f32 %v855, %v872
  %v900 = vmul.f32 %v856, %v876
  %v901 = vmul.f32 %v857, %v872
  %v902 = vmul.f32 %v858, %v876
  %v903 = vmul.f32 %v859, %v872
  %v904 = vmul.f32 %v860, %v876
  %v905 = vmul.f32 %v861, %v872
  %v906 = vmul.f32 %v862, %v876
  %v907 = vmul.f32 %v863, %v872
  %v908 = vmul.f32 %v864, %v876
  %v909 = vmul.f32 %v865, %v872
  %v910 = vmul.f32 %v866, %v876
  %v911 = vadd.f32 %v879, %v880
  %912 = vadd.xlane.f32.xlu0 %v911
  %v913 = vpop.xlane.xlu0 %912
  %v914 = vadd.f32 %v881, %v882
  %915 = vadd.xlane.f32.xlu0 %v914
  %v916 = vpop.xlane.xlu0 %915
  %v917 = vadd.f32 %v883, %v884
  %918 = vadd.xlane.f32.xlu0 %v917
  %v919 = vpop.xlane.xlu0 %918
  %v920 = vadd.f32 %v885, %v886
  %921 = vadd.xlane.f32.xlu0 %v920
  %v922 = vpop.xlane.xlu0 %921
  %v923 = vadd.f32 %v887, %v888
  %924 = vadd.xlane.f32.xlu0 %v923
  %v925 = vpop.xlane.xlu0 %924
  %v926 = vadd.f32 %v889, %v890
  %927 = vadd.xlane.f32.xlu0 %v926
  %v928 = vpop.xlane.xlu0 %927
  %v929 = vadd.f32 %v891, %v892
  %930 = vadd.xlane.f32.xlu0 %v929
  %v931 = vpop.xlane.xlu0 %930
  %v932 = vadd.f32 %v893, %v894
  %933 = vadd.xlane.f32.xlu0 %v932
  %v934 = vpop.xlane.xlu0 %933
  %v935 = vadd.f32 %v895, %v896
  %936 = vadd.xlane.f32.xlu0 %v935
  %v937 = vpop.xlane.xlu0 %936
  %v938 = vadd.f32 %v897, %v898
  %939 = vadd.xlane.f32.xlu0 %v938
  %v940 = vpop.xlane.xlu0 %939
  %v941 = vadd.f32 %v899, %v900
  %942 = vadd.xlane.f32.xlu0 %v941
  %v943 = vpop.xlane.xlu0 %942
  %v944 = vadd.f32 %v901, %v902
  %945 = vadd.xlane.f32.xlu0 %v944
  %v946 = vpop.xlane.xlu0 %945
  %v947 = vadd.f32 %v903, %v904
  %948 = vadd.xlane.f32.xlu0 %v947
  %v949 = vpop.xlane.xlu0 %948
  %v950 = vadd.f32 %v905, %v906
  %951 = vadd.xlane.f32.xlu0 %v950
  %v952 = vpop.xlane.xlu0 %951
  %v953 = vadd.f32 %v907, %v908
  %954 = vadd.xlane.f32.xlu0 %v953
  %v955 = vpop.xlane.xlu0 %954
  %v956 = vadd.f32 %v909, %v910
  %957 = vadd.xlane.f32.xlu0 %v956
  %v958 = vpop.xlane.xlu0 %957
  %959 = vxpose.xlu0.b32.start [1/16] %v913, 128
  %960 = vxpose.xlu0.b32.cont [2/16] %v916, 128
  %961 = vxpose.xlu0.b32.cont [3/16] %v919, 128
  %962 = vxpose.xlu0.b32.cont [4/16] %v922, 128
  %963 = vxpose.xlu0.b32.cont [5/16] %v925, 128
  %964 = vxpose.xlu0.b32.cont [6/16] %v928, 128
  %965 = vxpose.xlu0.b32.cont [7/16] %v931, 128
  %966 = vxpose.xlu0.b32.cont [8/16] %v934, 128
  %967 = vxpose.xlu0.b32.cont [9/16] %v937, 128
  %968 = vxpose.xlu0.b32.cont [10/16] %v940, 128
  %969 = vxpose.xlu0.b32.cont [11/16] %v943, 128
  %970 = vxpose.xlu0.b32.cont [12/16] %v946, 128
  %971 = vxpose.xlu0.b32.cont [13/16] %v949, 128
  %972 = vxpose.xlu0.b32.cont [14/16] %v952, 128
  %973 = vxpose.xlu0.b32.cont [15/16] %v955, 128
  %974 = vxpose.xlu0.b32.end [16/16] %v958, 128
  %v975 = vpop.trf.xlu0
  %v976 = vpop.trf.xlu0
  %v977 = vpop.trf.xlu0
  %v978 = vpop.trf.xlu0
  %v979 = vpop.trf.xlu0
  %v980 = vpop.trf.xlu0
  %v981 = vpop.trf.xlu0
  %v982 = vpop.trf.xlu0
  %v983 = vpop.trf.xlu0
  %v984 = vpop.trf.xlu0
  %v985 = vpop.trf.xlu0
  %v986 = vpop.trf.xlu0
  %v987 = vpop.trf.xlu0
  %v988 = vpop.trf.xlu0
  %v989 = vpop.trf.xlu0
  %v990 = vpop.trf.xlu0
  %s991 = sld [smem:[#allocation2]]
  %v992 = vstv %s991
  %v993 = vadd.f32 %v975, %v992
  %v994 = vtanh.pop %v993
  %995 = vst [vmem:[%s5] sm:$0x1] %v994
  // Predicated region
  $region22: #{distance_regressor.1} parent=0 // pred_check
    _
  $region23: #{distance_regressor.1} parent=0 // pred_check_branch
    %997 = sbr.rel (0) target = $region25
  $region24: #{distance_regressor.1} parent=0 // pred_region
    _
  $region25: #{distance_regressor.1} parent=0 // pred_fallthru
    _
  // Predicated region
  $region26: #{distance_regressor.1} parent=0 // pred_check
    _
  $region27: #{distance_regressor.1} parent=0 // pred_check_branch
    %999 = sbr.rel (0) target = $region29
  $region28: #{distance_regressor.1} parent=0 // pred_region
    _
  $region29: #{distance_regressor.1} parent=0 // pred_fallthru
    _

</llo_original>
